<compile_context>
chip_gen: v7x
topology: tpu7x:2x2x1
jax: 0.10.0
libtpu: 0.0.40
codegen_flags: <defaults>
</compile_context>

<pallas_src>
import functools

import jax
import jax.numpy as jnp
from jax.experimental import pallas as pl
from jax.experimental.pallas import tpu as pltpu


def _cdiv(a, b):
    return (a + b - 1) // b


def _round_up(x, m):
    return _cdiv(x, m) * m


def _epilogue(y, b, g, beta, dim_out):
    """bias + LayerNorm(eps=1e-5, biased var) + exact erf GELU, all in f32."""
    y = y + b.astype(jnp.float32)
    inv_d = jnp.float32(1.0 / dim_out)
    # Two independent row reductions (sum, sum of squares) -> overlap on XLU.
    s1 = jnp.sum(y, axis=-1, keepdims=True)
    s2 = jnp.sum(y * y, axis=-1, keepdims=True)
    mean = s1 * inv_d
    var = s2 * inv_d - mean * mean          # E[y^2] - mean^2 (biased variance)
    z = (y - mean) * jax.lax.rsqrt(var + jnp.float32(1e-5))
    z = z * g.astype(jnp.float32) + beta.astype(jnp.float32)
    # Exact (erf-based) GELU — matches torch.nn.GELU() default.
    half_z = 0.5 * z
    return half_z + half_z * jax.lax.erf(z * jnp.float32(0.7071067811865476))


def _fullk_kernel(x_ref, w_ref, b_ref, g_ref, beta_ref, o_ref, *, dim_out):
    # x_ref: (tm, dim_in); w_ref: (dim_in, dim_out) resident, single-buffered.
    y = jnp.dot(x_ref[...], w_ref[...], preferred_element_type=jnp.float32)
    o_ref[...] = _epilogue(y, b_ref[...], g_ref[...], beta_ref[...],
                           dim_out).astype(o_ref.dtype)


def _ktiled_kernel(x_ref, w_ref, b_ref, g_ref, beta_ref, o_ref, acc_ref, *,
                   dim_out):
    # Grid = (row tiles, K tiles); acc_ref is an f32 VMEM accumulator that is
    # resident across the (arbitrary) K axis.
    k = pl.program_id(1)

    @pl.when(k == 0)
    def _():
        acc_ref[...] = jnp.zeros_like(acc_ref)

    acc_ref[...] += jnp.dot(x_ref[...], w_ref[...],
                            preferred_element_type=jnp.float32)

    @pl.when(k == pl.num_programs(1) - 1)
    def _():
        o_ref[...] = _epilogue(acc_ref[...], b_ref[...], g_ref[...],
                               beta_ref[...], dim_out).astype(o_ref.dtype)


def _const_spec(shape):
    """Grid-invariant operand: single-buffered if pipeline_mode is supported."""
    idx = lambda *_: (0,) * len(shape)
    try:
        return pl.BlockSpec(shape, idx, pipeline_mode=pl.Buffered(1))
    except TypeError:  # older BlockSpec without pipeline_mode kwarg
        return pl.BlockSpec(shape, idx)


def shadow_skip_adapter(x, w, b, gamma, beta, *, tm=512):
    """GELU(LayerNorm(x @ w + b)) with PyTorch defaults.

    x: [B, N, dim_in]; w: [dim_in, dim_out] (nn.Linear weight, pre-transposed);
    b / gamma / beta: [dim_out].
    """
    B, N, dim_in = x.shape
    dim_out = w.shape[1]
    M = B * N

    x_it = jnp.dtype(x.dtype).itemsize
    w_it = jnp.dtype(w.dtype).itemsize
    p_it = jnp.dtype(b.dtype).itemsize

    # Sublane packing factor of the input dtype (8 for f32, 16 for bf16, ...).
    pack = 8 * max(1, 4 // x_it)

    # ---- generation-aware VMEM budget (~85% of physical per-TC VMEM). ----
    try:
        vmem_phys = int(pltpu.get_tpu_info().vmem_capacity_bytes)
    except Exception:
        vmem_phys = 64 << 20  # conservative (v7x-sized) fallback
    vmem_cap = min(int(vmem_phys * 0.85), 112 << 20)

    # ---- optional K tiling of dim_in when the resident weight is too big. ---
    w_bytes = dim_in * dim_out * w_it
    w_budget = min(20 << 20, vmem_cap // 3)
    tk = dim_in
    if w_bytes > w_budget:
        cand = dim_in
        # Halve dim_in while the halves stay 128-aligned and the (double
        # buffered) weight block is still over budget.
        while (cand % 2 == 0 and (cand // 2) % 128 == 0
               and 2 * cand * dim_out * w_it > w_budget):
            cand //= 2
        if cand < dim_in:
            tk = cand
    k_tiled = tk < dim_in
    # TODO(synk): if dim_in is large but has no 128-aligned power-of-two
    # divisor, we fall back to the resident-weight path.

    # ---- row tile sizing. ----
    tm = _round_up(max(tm, pack), pack)
    tm = min(tm, _round_up(M, pack))
    # Give both v7x TensorCores work (grid >= 2) when there are enough rows.
    if _cdiv(M, tm) < 2 and M > pack:
        tm = max(pack, _round_up(_cdiv(M, 2), pack))

    def vmem_bytes(tm_):
        xin = 2 * tm_ * tk * x_it            # x tile (double buffered)
        out = 2 * tm_ * dim_out * x_it       # output tile (double buffered)
        if k_tiled:
            wgt = 2 * tk * dim_out * w_it    # weight K-block (double buffered)
            acc = tm_ * dim_out * 4          # f32 accumulator scratch
        else:
            wgt = dim_in * dim_out * w_it    # resident weight (single buffered)
            acc = 0
        return xin + out + wgt + acc + 3 * dim_out * p_it

    while tm > pack and vmem_bytes(tm) > vmem_cap:
        tm = max(pack, _round_up(tm // 2, pack))

    vmem_limit = int(min(max(vmem_bytes(tm) + (4 << 20), 32 << 20), vmem_cap))

    # ---- no full-array pads/slices: only free reshapes + tiny param reshape.
    x2 = x.reshape(M, dim_in)
    b2 = b.reshape(1, dim_out)
    g2 = gamma.reshape(1, dim_out)
    be2 = beta.reshape(1, dim_out)

    grid_m = _cdiv(M, tm)

    if k_tiled:
        grid = (grid_m, dim_in // tk)
        in_specs = [
            pl.BlockSpec((tm, tk), lambda i, k: (i, k)),          # x rows
            pl.BlockSpec((tk, dim_out), lambda i, k: (k, 0)),     # weight K-blk
            _const_spec((1, dim_out)),                            # bias
            _const_spec((1, dim_out)),                            # gamma
            _const_spec((1, dim_out)),                            # beta
        ]
        out_specs = pl.BlockSpec((tm, dim_out), lambda i, k: (i, 0))
        scratch = [pltpu.VMEM((tm, dim_out), jnp.float32)]
        kernel = functools.partial(_ktiled_kernel, dim_out=dim_out)
        dims = ("parallel", "arbitrary")
    else:
        grid = (grid_m,)
        in_specs = [
            pl.BlockSpec((tm, dim_in), lambda i: (i, 0)),         # x rows
            _const_spec((dim_in, dim_out)),                       # weight
            _const_spec((1, dim_out)),                            # bias
            _const_spec((1, dim_out)),                            # gamma
            _const_spec((1, dim_out)),                            # beta
        ]
        out_specs = pl.BlockSpec((tm, dim_out), lambda i: (i, 0))
        scratch = []
        kernel = functools.partial(_fullk_kernel, dim_out=dim_out)
        dims = ("parallel",)

    out = pl.pallas_call(
        kernel,
        out_shape=jax.ShapeDtypeStruct((M, dim_out), x.dtype),
        grid_spec=pltpu.PrefetchScalarGridSpec(
            num_scalar_prefetch=0,
            grid=grid,
            in_specs=in_specs,
            out_specs=out_specs,
            scratch_shapes=scratch,
        ),
        compiler_params=pltpu.CompilerParams(
            dimension_semantics=dims,
            vmem_limit_bytes=vmem_limit,
        ),
    )(x2, w, b2, g2, be2)

    return out.reshape(B, N, dim_out)


def _reference(x, w, b, gamma, beta):
    y = jnp.einsum("bni,io->bno", x, w) + b
    mean = jnp.mean(y, axis=-1, keepdims=True)
    var = jnp.mean((y - mean) ** 2, axis=-1, keepdims=True)
    z = (y - mean) / jnp.sqrt(var + 1e-5) * gamma + beta
    return 0.5 * z * (1.0 + jax.lax.erf(z / jnp.sqrt(2.0)))


if __name__ == "__main__":
    # Small shapes consistent with the module: tokens with hidden dims.
    B, N, dim_in, dim_out = 2, 8, 32, 64

    key = jax.random.PRNGKey(0)
    kx, kw, kb = jax.random.split(key, 3)

    x = jax.random.normal(kx, (B, N, dim_in), dtype=jnp.float32)

    # Deterministic parameter init (mimics nn.Linear default uniform bounds).
    bound = 1.0 / jnp.sqrt(jnp.float32(dim_in))
    w = jax.random.uniform(kw, (dim_in, dim_out), jnp.float32, -bound, bound)
    b = jax.random.uniform(kb, (dim_out,), jnp.float32, -bound, bound)
    gamma = jnp.ones((dim_out,), jnp.float32)   # LayerNorm default weight
    beta = jnp.zeros((dim_out,), jnp.float32)   # LayerNorm default bias

    out = shadow_skip_adapter(x, w, b, gamma, beta)
    out = jax.block_until_ready(out)

    ref = _reference(x, w, b, gamma, beta)
    assert out.shape == (B, N, dim_out)
    assert jnp.allclose(out, ref, atol=2e-5, rtol=2e-5), "mismatch vs reference"

    print("KERNEL_OK")
</pallas_src>

<mosaic_0001>
module attributes {stable_mosaic.version = 11 : i64} {
  func.func @_fullk_kernel(%arg0: i32, %arg1: memref<8x32xf32, #tpu.memory_space<vmem>>, %arg2: memref<32x64xf32, #tpu.memory_space<vmem>>, %arg3: memref<1x64xf32, #tpu.memory_space<vmem>>, %arg4: memref<1x64xf32, #tpu.memory_space<vmem>>, %arg5: memref<1x64xf32, #tpu.memory_space<vmem>>, %arg6: memref<8x64xf32, #tpu.memory_space<vmem>>) attributes {dimension_semantics = [#tpu.dimension_semantics<parallel>], iteration_bounds = array<i64: 2>, scalar_prefetch = 0 : i64, scratch_operands = 0 : i64, tpu.core_type = #tpu.core_type<tc>, window_params = [{transform_indices = @transform_0, window_bounds = array<i64: 8, 32>}, {pipeline_mode = #tpu.pipeline_mode<synchronous>, transform_indices = @transform_1, window_bounds = array<i64: 32, 64>}, {pipeline_mode = #tpu.pipeline_mode<synchronous>, transform_indices = @transform_2, window_bounds = array<i64: 1, 64>}, {pipeline_mode = #tpu.pipeline_mode<synchronous>, transform_indices = @transform_3, window_bounds = array<i64: 1, 64>}, {pipeline_mode = #tpu.pipeline_mode<synchronous>, transform_indices = @transform_4, window_bounds = array<i64: 1, 64>}, {transform_indices = @transform_5, window_bounds = array<i64: 8, 64>}]} {
    %c0 = arith.constant 0 : index
    %c0_0 = arith.constant 0 : index
    %0 = vector.load %arg1[%c0, %c0_0] : memref<8x32xf32, #tpu.memory_space<vmem>>, vector<8x32xf32>
    %c0_1 = arith.constant 0 : index
    %c0_2 = arith.constant 0 : index
    %1 = vector.load %arg2[%c0_1, %c0_2] : memref<32x64xf32, #tpu.memory_space<vmem>>, vector<32x64xf32>
    %cst = arith.constant dense<0.000000e+00> : vector<8x64xf32>
    %2 = tpu.matmul %0, %1, %cst {dimension_numbers = #tpu.dot_dimension_numbers<[1], [0], [0], [1], [0, 0, 1, 1], [], []>} : vector<8x32xf32>, vector<32x64xf32>, vector<8x64xf32> -> vector<8x64xf32>
    %c0_3 = arith.constant 0 : index
    %c0_4 = arith.constant 0 : index
    %3 = vector.load %arg3[%c0_3, %c0_4] : memref<1x64xf32, #tpu.memory_space<vmem>>, vector<1x64xf32>
    %c0_5 = arith.constant 0 : index
    %c0_6 = arith.constant 0 : index
    %4 = vector.load %arg4[%c0_5, %c0_6] : memref<1x64xf32, #tpu.memory_space<vmem>>, vector<1x64xf32>
    %c0_7 = arith.constant 0 : index
    %c0_8 = arith.constant 0 : index
    %5 = vector.load %arg5[%c0_7, %c0_8] : memref<1x64xf32, #tpu.memory_space<vmem>>, vector<1x64xf32>
    %6 = vector.broadcast %3 : vector<1x64xf32> to vector<8x64xf32>
    %7 = arith.addf %2, %6 : vector<8x64xf32>
    %cst_9 = arith.constant dense<0.000000e+00> : vector<8xf32>
    %8 = vector.multi_reduction <add>, %7, %cst_9 [1] : vector<8x64xf32> to vector<8xf32>
    %9 = vector.shape_cast %8 : vector<8xf32> to vector<8x1xf32>
    %10 = arith.mulf %7, %7 : vector<8x64xf32>
    %cst_10 = arith.constant dense<0.000000e+00> : vector<8xf32>
    %11 = vector.multi_reduction <add>, %10, %cst_10 [1] : vector<8x64xf32> to vector<8xf32>
    %12 = vector.shape_cast %11 : vector<8xf32> to vector<8x1xf32>
    %cst_11 = arith.constant 1.562500e-02 : f32
    %13 = vector.broadcast %cst_11 : f32 to vector<8x1xf32>
    %14 = arith.mulf %9, %13 : vector<8x1xf32>
    %cst_12 = arith.constant 1.562500e-02 : f32
    %15 = vector.broadcast %cst_12 : f32 to vector<8x1xf32>
    %16 = arith.mulf %12, %15 : vector<8x1xf32>
    %17 = arith.mulf %14, %14 : vector<8x1xf32>
    %18 = arith.subf %16, %17 : vector<8x1xf32>
    %19 = vector.broadcast %14 : vector<8x1xf32> to vector<8x64xf32>
    %20 = arith.subf %7, %19 : vector<8x64xf32>
    %cst_13 = arith.constant 9.99999974E-6 : f32
    %21 = vector.broadcast %cst_13 : f32 to vector<8x1xf32>
    %22 = arith.addf %18, %21 : vector<8x1xf32>
    %23 = math.rsqrt %22 : vector<8x1xf32>
    %24 = vector.broadcast %23 : vector<8x1xf32> to vector<8x64xf32>
    %25 = arith.mulf %20, %24 : vector<8x64xf32>
    %26 = vector.broadcast %4 : vector<1x64xf32> to vector<8x64xf32>
    %27 = arith.mulf %25, %26 : vector<8x64xf32>
    %28 = vector.broadcast %5 : vector<1x64xf32> to vector<8x64xf32>
    %29 = arith.addf %27, %28 : vector<8x64xf32>
    %cst_14 = arith.constant 5.000000e-01 : f32
    %30 = vector.broadcast %cst_14 : f32 to vector<8x64xf32>
    %31 = arith.mulf %30, %29 : vector<8x64xf32>
    %cst_15 = arith.constant 0.707106769 : f32
    %32 = vector.broadcast %cst_15 : f32 to vector<8x64xf32>
    %33 = arith.mulf %29, %32 : vector<8x64xf32>
    %34 = math.erf %33 : vector<8x64xf32>
    %35 = arith.mulf %31, %34 : vector<8x64xf32>
    %36 = arith.addf %31, %35 : vector<8x64xf32>
    %c0_16 = arith.constant 0 : index
    %c0_17 = arith.constant 0 : index
    %37 = vector.load %arg6[%c0_16, %c0_17] : memref<8x64xf32, #tpu.memory_space<vmem>>, vector<8x64xf32>
    tpu.vector_store %arg6[%c0_16, %c0_17], %36 {strides = array<i32>} : memref<8x64xf32, #tpu.memory_space<vmem>>, vector<8x64xf32>,
    return
  }
  func.func @transform_0(%arg0: i32) -> (i32, i32) {
    %c0_i32 = arith.constant 0 : i32
    %c0_i32_0 = arith.constant 0 : i32
    return %arg0, %c0_i32 : i32, i32
  }
  func.func @transform_1(%arg0: i32) -> (i32, i32) {
    %c0_i32 = arith.constant 0 : i32
    %c0_i32_0 = arith.constant 0 : i32
    %c0_i32_1 = arith.constant 0 : i32
    return %c0_i32, %c0_i32_0 : i32, i32
  }
  func.func @transform_2(%arg0: i32) -> (i32, i32) {
    %c0_i32 = arith.constant 0 : i32
    %c0_i32_0 = arith.constant 0 : i32
    %c0_i32_1 = arith.constant 0 : i32
    return %c0_i32, %c0_i32_0 : i32, i32
  }
  func.func @transform_3(%arg0: i32) -> (i32, i32) {
    %c0_i32 = arith.constant 0 : i32
    %c0_i32_0 = arith.constant 0 : i32
    %c0_i32_1 = arith.constant 0 : i32
    return %c0_i32, %c0_i32_0 : i32, i32
  }
  func.func @transform_4(%arg0: i32) -> (i32, i32) {
    %c0_i32 = arith.constant 0 : i32
    %c0_i32_0 = arith.constant 0 : i32
    %c0_i32_1 = arith.constant 0 : i32
    return %c0_i32, %c0_i32_0 : i32, i32
  }
  func.func @transform_5(%arg0: i32) -> (i32, i32) {
    %c0_i32 = arith.constant 0 : i32
    %c0_i32_0 = arith.constant 0 : i32
    return %arg0, %c0_i32 : i32, i32
  }
}

</mosaic_0001>

<llo_original>
// kernel: tpu_custom_call.1
$region0: #{tpu_custom_call.1}
  #allocation0 [shape = 'u32[]', space=smem, size = 0x4, offset = 0x4, fixed_abs, tag = 'smem constant byte address 0x4 - core index']
  #allocation1 [shape = 'u32[144,128]{1,0:T(1,128)}', space=vmem, size = 0x12000, scoped, tag = 'internal scratch']
  %s0 = inlined_call_operand.hbm [shape: f32[16,32], index: 0, kind: input, shape index: {}]
  %s1 = inlined_call_operand.hbm [shape: f32[32,64], index: 1, kind: input, shape index: {}]
  %s2 = inlined_call_operand.vmem [shape: f32[1,64], index: 2, kind: input, shape index: {}]
  %s3 = inlined_call_operand.vmem [shape: f32[1,64], index: 3, kind: input, shape index: {}]
  %s4 = inlined_call_operand.vmem [shape: f32[1,64], index: 4, kind: input, shape index: {}]
  %s5 = inlined_call_operand.hbm [shape: f32[16,64], index: 5, kind: output, shape index: {}]
  %s6 = sld [smem:[#allocation0]]
  $region61: #{tpu_custom_call.1} parent=0
    _
  %s8 = ssub.s32 1, %s6
  %s9 = scalar_select 0, %s8, %s6
  $region1: #{tpu_custom_call.1} parent=0
    #allocation2 [shape = 'u8[8192]{0}', space=vmem, size = 0x2000, scoped, tag = 'input window, operand 0']
    #allocation3 [shape = 's32[2]{0}', space=sflag, size = 0x8, scoped, tag = 'scoped memory for tpu_custom_call.1']
    #allocation4 [shape = 's32[2]{0}', space=sflag, size = 0x8, scoped, tag = 'scoped memory for tpu_custom_call.1']
    #allocation5 [shape = 'u8[16384]{0}', space=vmem, size = 0x4000, scoped, tag = 'input window, operand 1, single buffered']
    #allocation6 [shape = 's32[1]{0}', space=sflag, size = 0x4, scoped, tag = 'scoped memory for tpu_custom_call.1']
    #allocation7 [shape = 'u8[8192]{0}', space=vmem, size = 0x2000, scoped, tag = 'output window, operand 0']
    %10 = vsyncpa [#allocation3], 0
    %s11 = scalar_lea.sflag [#allocation3], 1
    %12 = vsyncpa %s11, 0
    %13 = vsyncpa [#allocation6], 0
    %14 = vsyncpa [#allocation4], 0
    %s15 = scalar_lea.sflag [#allocation4], 1
    %16 = vsyncpa %s15, 0
    loop: start=0, step=1, limit=4
    $region2: #{tpu_custom_call.1} parent=1 // loop_pre_header
      _
    $region3: #{tpu_custom_call.1} parent=1 // loop_header
      %s18 = sphi 0, %s22
      %p19 = scmp.ge.s32.totalorder %s18, 4
      %s28 = sphi 0, %s30
      %s31 = sphi 0, %s28
      %s32 = sphi 0, %s31
      %s48 = sphi 0, %s32
      %s52 = sphi 0, %s52
      %s54 = sphi 0, %s52
      %s55 = sphi 0, %s54
      %s69 = sphi 0, %s55
      %s73 = sphi 0, %s73
      %s75 = sphi 0, %s73
      %s76 = sphi 0, %s75
      %s90 = sphi 0, %s76
      %s94 = sphi 0, %s94
      %s96 = sphi 0, %s94
      %s97 = sphi 0, %s96
      %s111 = sphi 0, %s97
      %s115 = sphi 0, %s115
      %s117 = sphi 0, %s115
      %s118 = sphi 0, %s117
      %s132 = sphi 0, %s118
      %s138 = sphi 0, %s140
      %s141 = sphi 0, %s138
      %s142 = sphi 0, %s141
      %s158 = sphi 0, %s142
    $region4: #{tpu_custom_call.1} parent=1 // loop_header_branch
      %21 = sbr.rel (%p19) target = $region8
    $region5: #{tpu_custom_call.1} parent=1 // loop_body
      %s23 = ssub.s32 %s18, 1
      %s24 = ssub.s32 %s18, 2
      %s25 = sadd.s32 %s18, 1
      %s26 = ssub.s32 %s18, %s25
      %p27 = scmp.eq.s32.totalorder %s26, 0
      %s29 = sadd.s32 %s28, 1
      %s30 = scalar_select %p27, %s28, %s29
      %p33 = pneg %p27
      %p34 = scmp.eq.s32.totalorder %s18, 1
      %p35 = por %p33, %p34
      %p36 = scmp.ne.s32.totalorder %s28, %s31
      %p37 = scmp.eq.s32.totalorder %s18, 0
      %p38 = por %p36, %p37
      %p39 = scmp.ne.s32.totalorder %s28, %s31
      %p40 = scmp.eq.s32.totalorder %s23, 1
      %p41 = por %p39, %p40
      %p42 = scmp.ne.s32.totalorder %s31, %s32
      %p43 = scmp.eq.s32.totalorder %s23, 0
      %p44 = por %p42, %p43
      %p45 = scmp.ne.s32.totalorder %s31, %s32
      %p46 = scmp.eq.s32.totalorder %s24, 1
      %p47 = por %p45, %p46
      %p49 = scmp.ne.s32.totalorder %s32, %s48
      %p50 = scmp.eq.s32.totalorder %s24, 0
      %p51 = por %p49, %p50
      %s53 = sadd.s32 %s52, 1
      %p56 = scmp.eq.s32.totalorder %s18, 1
      %p57 = scmp.ne.s32.totalorder %s52, %s54
      %p58 = scmp.eq.s32.totalorder %s18, 0
      %p59 = por %p57, %p58
      %p60 = scmp.ne.s32.totalorder %s52, %s54
      %p61 = scmp.eq.s32.totalorder %s23, 1
      %p62 = por %p60, %p61
      %p63 = scmp.ne.s32.totalorder %s54, %s55
      %p64 = scmp.eq.s32.totalorder %s23, 0
      %p65 = por %p63, %p64
      %p66 = scmp.ne.s32.totalorder %s54, %s55
      %p67 = scmp.eq.s32.totalorder %s24, 1
      %p68 = por %p66, %p67
      %p70 = scmp.ne.s32.totalorder %s55, %s69
      %p71 = scmp.eq.s32.totalorder %s24, 0
      %p72 = por %p70, %p71
      %s74 = sadd.s32 %s73, 1
      %p77 = scmp.eq.s32.totalorder %s18, 1
      %p78 = scmp.ne.s32.totalorder %s73, %s75
      %p79 = scmp.eq.s32.totalorder %s18, 0
      %p80 = por %p78, %p79
      %p81 = scmp.ne.s32.totalorder %s73, %s75
      %p82 = scmp.eq.s32.totalorder %s23, 1
      %p83 = por %p81, %p82
      %p84 = scmp.ne.s32.totalorder %s75, %s76
      %p85 = scmp.eq.s32.totalorder %s23, 0
      %p86 = por %p84, %p85
      %p87 = scmp.ne.s32.totalorder %s75, %s76
      %p88 = scmp.eq.s32.totalorder %s24, 1
      %p89 = por %p87, %p88
      %p91 = scmp.ne.s32.totalorder %s76, %s90
      %p92 = scmp.eq.s32.totalorder %s24, 0
      %p93 = por %p91, %p92
      %s95 = sadd.s32 %s94, 1
      %p98 = scmp.eq.s32.totalorder %s18, 1
      %p99 = scmp.ne.s32.totalorder %s94, %s96
      %p100 = scmp.eq.s32.totalorder %s18, 0
      %p101 = por %p99, %p100
      %p102 = scmp.ne.s32.totalorder %s94, %s96
      %p103 = scmp.eq.s32.totalorder %s23, 1
      %p104 = por %p102, %p103
      %p105 = scmp.ne.s32.totalorder %s96, %s97
      %p106 = scmp.eq.s32.totalorder %s23, 0
      %p107 = por %p105, %p106
      %p108 = scmp.ne.s32.totalorder %s96, %s97
      %p109 = scmp.eq.s32.totalorder %s24, 1
      %p110 = por %p108, %p109
      %p112 = scmp.ne.s32.totalorder %s97, %s111
      %p113 = scmp.eq.s32.totalorder %s24, 0
      %p114 = por %p112, %p113
      %s116 = sadd.s32 %s115, 1
      %p119 = scmp.eq.s32.totalorder %s18, 1
      %p120 = scmp.ne.s32.totalorder %s115, %s117
      %p121 = scmp.eq.s32.totalorder %s18, 0
      %p122 = por %p120, %p121
      %p123 = scmp.ne.s32.totalorder %s115, %s117
      %p124 = scmp.eq.s32.totalorder %s23, 1
      %p125 = por %p123, %p124
      %p126 = scmp.ne.s32.totalorder %s117, %s118
      %p127 = scmp.eq.s32.totalorder %s23, 0
      %p128 = por %p126, %p127
      %p129 = scmp.ne.s32.totalorder %s117, %s118
      %p130 = scmp.eq.s32.totalorder %s24, 1
      %p131 = por %p129, %p130
      %p133 = scmp.ne.s32.totalorder %s118, %s132
      %p134 = scmp.eq.s32.totalorder %s24, 0
      %p135 = por %p133, %p134
      %s136 = ssub.s32 %s18, %s25
      %p137 = scmp.eq.s32.totalorder %s136, 0
      %s139 = sadd.s32 %s138, 1
      %s140 = scalar_select %p137, %s138, %s139
      %p143 = pneg %p137
      %p144 = scmp.eq.s32.totalorder %s18, 1
      %p145 = por %p143, %p144
      %p146 = scmp.ne.s32.totalorder %s138, %s141
      %p147 = scmp.eq.s32.totalorder %s18, 0
      %p148 = por %p146, %p147
      %p149 = scmp.ne.s32.totalorder %s138, %s141
      %p150 = scmp.eq.s32.totalorder %s23, 1
      %p151 = por %p149, %p150
      %p152 = scmp.ne.s32.totalorder %s141, %s142
      %p153 = scmp.eq.s32.totalorder %s23, 0
      %p154 = por %p152, %p153
      %p155 = scmp.ne.s32.totalorder %s141, %s142
      %p156 = scmp.eq.s32.totalorder %s24, 1
      %p157 = por %p155, %p156
      %p159 = scmp.ne.s32.totalorder %s142, %s158
      %p160 = scmp.eq.s32.totalorder %s24, 0
      %p161 = por %p159, %p160
      %p162 = scmp.le.s32.totalorder 1, %s18
      %p163 = scmp.lt.s32.totalorder %s18, 3
      %p164 = pnand %p162, %p163
      %p165 = pneg %p164
      // Predicated region
      $region9: #{tpu_custom_call.1} parent=5 // pred_check
        _
      $region10: #{tpu_custom_call.1} parent=5 // pred_check_branch
        %167 = sbr.rel (%p164) target = $region12
      $region11: #{tpu_custom_call.1} parent=5 // pred_region
        %s168 = ssub.s32 %s18, 1
        // Predicated region
        $region13: #{tpu_custom_call.1} parent=11 // pred_check
          %p169 = pneg %p65
        $region14: #{tpu_custom_call.1} parent=11 // pred_check_branch
          %171 = sbr.rel (%p169) target = $region16
        $region15: #{tpu_custom_call.1} parent=11 // pred_region
          %s173 = ssub.s32 512, 512
          %174 = vsyncadd [#allocation6], %s173
          %s175 = sshll.u32 [#allocation5], 4
          %s176 = int_to_ptr.vmem [resolvable:$true] %s175
          %181 = dma.hbm_to_vmem [thread:$0]  %s1, 512, %s176, [#allocation6], 128, 128, 8
        $region16: #{tpu_custom_call.1} parent=11 // pred_fallthru
          _
        // Predicated region
        $region17: #{tpu_custom_call.1} parent=11 // pred_check
          %p182 = pneg %p86
        $region18: #{tpu_custom_call.1} parent=11 // pred_check_branch
          %184 = sbr.rel (%p182) target = $region20
        $region19: #{tpu_custom_call.1} parent=11 // pred_region
          _
        $region20: #{tpu_custom_call.1} parent=11 // pred_fallthru
          _
        // Predicated region
        $region21: #{tpu_custom_call.1} parent=11 // pred_check
          %p185 = pneg %p107
        $region22: #{tpu_custom_call.1} parent=11 // pred_check_branch
          %187 = sbr.rel (%p185) target = $region24
        $region23: #{tpu_custom_call.1} parent=11 // pred_region
          _
        $region24: #{tpu_custom_call.1} parent=11 // pred_fallthru
          _
        // Predicated region
        $region25: #{tpu_custom_call.1} parent=11 // pred_check
          %p188 = pneg %p128
        $region26: #{tpu_custom_call.1} parent=11 // pred_check_branch
          %190 = sbr.rel (%p188) target = $region28
        $region27: #{tpu_custom_call.1} parent=11 // pred_region
          _
        $region28: #{tpu_custom_call.1} parent=11 // pred_fallthru
          _
      $region12: #{tpu_custom_call.1} parent=5 // pred_fallthru
        _
      %p191 = scmp.lt.s32.totalorder %s18, 2
      // Predicated region
      $region29: #{tpu_custom_call.1} parent=5 // pred_check
        %p192 = pneg %p191
      $region30: #{tpu_custom_call.1} parent=5 // pred_check_branch
        %194 = sbr.rel (%p192) target = $region32
      $region31: #{tpu_custom_call.1} parent=5 // pred_region
        // Predicated region
        $region33: #{tpu_custom_call.1} parent=31 // pred_check
          %p195 = pneg %p38
        $region34: #{tpu_custom_call.1} parent=31 // pred_check_branch
          %197 = sbr.rel (%p195) target = $region36
        $region35: #{tpu_custom_call.1} parent=31 // pred_region
          %s198 = sand.u32 %s28, 1
          %s199 = scalar_lea.sflag [#allocation3], %s198
          %s200 = sand.u32 %s28, 1
          %s201 = smul.addr %s200, 8
          %s202 = scalar_lea.vmem [#allocation2], %s201
          %s204 = ssub.s32 128, 128
          %205 = vsyncadd %s199, %s204
          %s206 = smul.addr %s18, 128
          %s207 = scalar_lea.hbm %s0, %s206
          %s209 = sshll.u32 %s202, 4
          %s210 = int_to_ptr.vmem [resolvable:$true] %s209
          %212 = dma.hbm_to_vmem [thread:$0]  %s207, 128, %s210, %s199
        $region36: #{tpu_custom_call.1} parent=31 // pred_fallthru
          _
      $region32: #{tpu_custom_call.1} parent=5 // pred_fallthru
        _
      %p213 = scmp.le.s32.totalorder 1, %s18
      %p214 = scmp.lt.s32.totalorder %s18, 3
      %p215 = pnand %p213, %p214
      %p216 = pneg %p215
      // Predicated region
      $region37: #{tpu_custom_call.1} parent=5 // pred_check
        _
      $region38: #{tpu_custom_call.1} parent=5 // pred_check_branch
        %218 = sbr.rel (%p215) target = $region40
      $region39: #{tpu_custom_call.1} parent=5 // pred_region
        %s219 = ssub.s32 %s18, 1
        %s220 = sand.u32 %s31, 1
        %s221 = scalar_lea.sflag [#allocation3], %s220
        %s222 = sand.u32 %s31, 1
        %s223 = smul.addr %s222, 8
        %s224 = scalar_lea.vmem [#allocation2], %s223
        // Predicated region
        $region41: #{tpu_custom_call.1} parent=39 // pred_check
          %p225 = pneg %p44
        $region42: #{tpu_custom_call.1} parent=39 // pred_check_branch
          %227 = sbr.rel (%p225) target = $region44
        $region43: #{tpu_custom_call.1} parent=39 // pred_region
          %228 = dma.done %s221, 128
        $region44: #{tpu_custom_call.1} parent=39 // pred_fallthru
          _
        // Predicated region
        $region45: #{tpu_custom_call.1} parent=39 // pred_check
          %p229 = pneg %p65
        $region46: #{tpu_custom_call.1} parent=39 // pred_check_branch
          %231 = sbr.rel (%p229) target = $region48
        $region47: #{tpu_custom_call.1} parent=39 // pred_region
          %232 = dma.done [#allocation6], 512
        $region48: #{tpu_custom_call.1} parent=39 // pred_fallthru
          _
        %s233 = sand.u32 %s31, 1
        %s234 = scalar_lea.sflag [#allocation3], %s233
        %s235 = sand.u32 %s31, 1
        %s236 = smul.addr %s235, 8
        %s237 = scalar_lea.vmem [#allocation2], %s236
        %p238 = pneg %p44
        %p239 = pneg %p41
        %p240 = pneg %p65
        %p241 = pneg %p62
        %p242 = pneg %p86
        %p243 = pneg %p83
        %p244 = pneg %p107
        %p245 = pneg %p104
        %p246 = pneg %p128
        %p247 = pneg %p125
        %p248 = pneg %p154
        %p249 = pneg %p151
        %s250 = sand.u32 %s141, 1
        %s251 = scalar_lea.sflag [#allocation4], %s250
        %s252 = sand.u32 %s141, 1
        %s253 = smul.addr %s252, 8
        %s254 = scalar_lea.vmem [#allocation7], %s253
        %v255 = vld [vmem:[%s224] sm:$0xff]
        %v256 = vld [vmem:[#allocation5] sm:$0xff]
        %v257 = vld [vmem:[#allocation5 + $0x8] sm:$0xff]
        %v258 = vld [vmem:[#allocation5 + $0x10] sm:$0xff]
        %v259 = vld [vmem:[#allocation5 + $0x18] sm:$0xff]
        %v260 = vld [vmem:[%s2] sm:$0x1]
        %v261 = vld [vmem:[%s3] sm:$0x1]
        %v262 = vld [vmem:[%s4] sm:$0x1]
        %v264 = vlaneseq
        %v265 = vshrl.u32 %v264, 7
        %v266 = vsub.s32 0, %v265
        %v267 = vrot.slane %v260, %v266
        %vm269 = vcmask 261120
        %v271 = vsel %vm269, %v255, 0
        %273 = vmatprep.subr.mxu0 0.0
        %274 = vmatpush1.msra.mxu0 %v256
        %275 = vmatprep.subr.mxu0 0.0
        %276 = vmatpush1.msra.mxu0 %v257
        %277 = vmatprep.subr.mxu0 0.0
        %278 = vmatpush1.msra.mxu0 %v258
        %279 = vmatprep.subr.mxu0 0.0
        %280 = vmatpush1.msra.mxu0 %v259
        %281 = vmatprep.subr.mxu0 0.0
        %282 = vmatpush1.msra.mxu0 0.0
        %283 = vmatprep.subr.mxu0 0.0
        %284 = vmatpush1.msra.mxu0 0.0
        %285 = vmatprep.subr.mxu0 0.0
        %286 = vmatpush1.msra.mxu0 0.0
        %287 = vmatprep.subr.mxu0 0.0
        %288 = vmatpush1.msra.mxu0 0.0
        %289 = vmatprep.subr.mxu0 0.0
        %290 = vmatpush1.msra.mxu0 0.0
        %291 = vmatprep.subr.mxu0 0.0
        %292 = vmatpush1.msra.mxu0 0.0
        %293 = vmatprep.subr.mxu0 0.0
        %294 = vmatpush1.msra.mxu0 0.0
        %295 = vmatprep.subr.mxu0 0.0
        %296 = vmatpush1.msra.mxu0 0.0
        %297 = vmatprep.subr.mxu0 0.0
        %298 = vmatpush1.msra.mxu0 0.0
        %299 = vmatprep.subr.mxu0 0.0
        %300 = vmatpush1.msra.mxu0 0.0
        %301 = vmatprep.subr.mxu0 0.0
        %302 = vmatpush1.msra.mxu0 0.0
        %303 = vmatprep.subr.mxu0 0.0
        %304 = vmatpush1.msra.mxu0 0.0
        %305 = vmatprep.subr.mxu0 0.0
        %306 = vmatpush1.msra.mxu0 0.0
        %307 = vmatprep.subr.mxu0 0.0
        %308 = vmatpush1.msra.mxu0 0.0
        %309 = vmatprep.subr.mxu0 0.0
        %310 = vmatpush1.msra.mxu0 0.0
        %311 = vmatprep.subr.mxu0 0.0
        %312 = vmatpush1.msra.mxu0 0.0
        %313 = vmatprep.subr.mxu0 0.0
        %314 = vmatpush1.msra.mxu0 0.0
        %315 = vmatprep.subr.mxu0 0.0
        %316 = vmatpush1.msra.mxu0 0.0
        %317 = vmatprep.subr.mxu0 0.0
        %318 = vmatpush1.msra.mxu0 0.0
        %319 = vmatprep.subr.mxu0 0.0
        %320 = vmatpush1.msra.mxu0 0.0
        %321 = vmatprep.subr.mxu0 0.0
        %322 = vmatpush1.msra.mxu0 0.0
        %323 = vmatprep.subr.mxu0 0.0
        %324 = vmatpush1.msra.mxu0 0.0
        %325 = vmatprep.subr.mxu0 0.0
        %326 = vmatpush1.msra.mxu0 0.0
        %327 = vmatprep.subr.mxu0 0.0
        %328 = vmatpush1.msra.mxu0 0.0
        %329 = vmatprep.subr.mxu0 0.0
        %330 = vmatpush1.msra.mxu0 0.0
        %331 = vmatprep.subr.mxu0 0.0
        %332 = vmatpush1.msra.mxu0 0.0
        %333 = vmatprep.subr.mxu0 0.0
        %334 = vmatpush1.msra.mxu0 0.0
        %335 = vmatprep.subr.mxu0 0.0
        %336 = vmatpush1.msra.mxu0 0.0
        %337 = vmatprep.mubr.f32.mxu0 0.0
        %338 = vmatmul.mubr.f32.gmra.mrb[0].mxu0 %v271
        %v339 = vpop.f32.mrb[0].mxu0
        %v340 = vadd.f32 %v267, %v339
        %v341 = vpop.f32.mrb[0].mxu0
        %342 = vdwg.mxu0
        %vm343 = vcmask 523264
        %v344 = vsel %vm343, %v340, 0.0
        %345 = vadd.xlane.f32.xlu0 %v344
        %v346 = vpop.xlane.xlu0 %345
        %v347 = vmul.f32 %v340, %v340
        %v348 = vsel %vm343, %v347, 0.0
        %349 = vadd.xlane.f32.xlu0 %v348
        %v350 = vpop.xlane.xlu0 %349
        %v351 = vmul.f32 %v346, 0.015625
        %v352 = vmul.f32 %v350, 0.015625
        %v353 = vmul.f32 %v351, %v351
        %v354 = vsub.f32 %v352, %v353
        %v355 = vsub.f32 %v340, %v351
        %v356 = vadd.f32 %v354, 1e-05
        %v357 = vrsqrt.pop %v356
        %v358 = vmul.f32 %v355, %v357
        %v360 = vlaneseq
        %v361 = vshrl.u32 %v360, 7
        %v362 = vsub.s32 0, %v361
        %v363 = vrot.slane %v261, %v362
        %v365 = vmul.f32 %v358, %v363
        %v367 = vlaneseq
        %v368 = vshrl.u32 %v367, 7
        %v369 = vsub.s32 0, %v368
        %v370 = vrot.slane %v262, %v369
        %v372 = vadd.f32 %v365, %v370
        %v373 = vmul.f32 %v372, 0.5
        %v374 = vmul.f32 %v372, 0.70710677
        %v375 = verf.f32.pop %v374
        %v376 = vmul.f32 %v373, %v375
        %v377 = vadd.f32 %v373, %v376
        %378 = vst.msk [vmem:[%s254] sm:$0xff] %vm343, %v377
        %s379 = sand.u32 %s141, 1
        %s380 = scalar_lea.sflag [#allocation4], %s379
        %s381 = sand.u32 %s141, 1
        %s382 = smul.addr %s381, 8
        %s383 = scalar_lea.vmem [#allocation7], %s382
        // Predicated region
        $region49: #{tpu_custom_call.1} parent=39 // pred_check
          %p384 = pneg %p151
        $region50: #{tpu_custom_call.1} parent=39 // pred_check_branch
          %386 = sbr.rel (%p384) target = $region52
        $region51: #{tpu_custom_call.1} parent=39 // pred_region
          %s388 = ssub.s32 128, 128
          %389 = vsyncadd %s380, %s388
          %s390 = smul.addr %s23, 128
          %s391 = scalar_lea.hbm %s5, %s390
          %s393 = sshll.u32 %s383, 4
          %s394 = int_to_ptr.vmem [resolvable:$true] %s393
          %396 = dma.vmem_to_hbm [thread:$0]  %s394, 128, %s391, %s380
        $region52: #{tpu_custom_call.1} parent=39 // pred_fallthru
          _
      $region40: #{tpu_custom_call.1} parent=5 // pred_fallthru
        _
      %p397 = scmp.le.s32.totalorder 2, %s18
      // Predicated region
      $region53: #{tpu_custom_call.1} parent=5 // pred_check
        %p398 = pneg %p397
      $region54: #{tpu_custom_call.1} parent=5 // pred_check_branch
        %400 = sbr.rel (%p398) target = $region56
      $region55: #{tpu_custom_call.1} parent=5 // pred_region
        %s401 = ssub.s32 %s18, 2
        // Predicated region
        $region57: #{tpu_custom_call.1} parent=55 // pred_check
          %p402 = pneg %p157
        $region58: #{tpu_custom_call.1} parent=55 // pred_check_branch
          %404 = sbr.rel (%p402) target = $region60
        $region59: #{tpu_custom_call.1} parent=55 // pred_region
          %s405 = sand.u32 %s142, 1
          %s406 = scalar_lea.sflag [#allocation4], %s405
          %s407 = sand.u32 %s142, 1
          %s408 = smul.addr %s407, 8
          %s409 = scalar_lea.vmem [#allocation7], %s408
          %410 = dma.done %s406, 128
        $region60: #{tpu_custom_call.1} parent=55 // pred_fallthru
          _
      $region56: #{tpu_custom_call.1} parent=5 // pred_fallthru
        _
    $region6: #{tpu_custom_call.1} parent=1 // loop_footer
      %s22 = sadd.s32 1, %s18
    $region7: #{tpu_custom_call.1} parent=1 // loop_footer_branch
      %17 = sbr.rel target = $region3
    $region8: #{tpu_custom_call.1} parent=1 // loop_exit
      _
    %411 = vsyncpa [#allocation3], 1
    %s412 = scalar_lea.sflag [#allocation3], 1
    %413 = vsyncpa %s412, 1
    %414 = vsyncpa [#allocation6], 1
    %415 = vsyncpa [#allocation4], 1
    %s416 = scalar_lea.sflag [#allocation4], 1
    %417 = vsyncpa %s416, 1

</llo_original>
